<compile_context>
chip_gen: v5e
topology: v5e:2x2
jax: 0.10.0
libtpu: 0.0.40
codegen_flags: <defaults>
</compile_context>

<pallas_src>
import jax
import jax.numpy as jnp
from jax.experimental import pallas as pl
from jax.experimental.pallas import tpu as pltpu


def _temporal_attn_kernel(x_ref, w_ref, b_ref, o_ref):
    # x_ref: (TM, L)  w_ref: (L, L)  b_ref: (1, L)  o_ref: (TM, L)
    x = x_ref[...]
    y = jnp.dot(x, w_ref[...], preferred_element_type=jnp.float32) + b_ref[...]
    attn = jnp.maximum(y, 0.0)                        # F.relu
    o_ref[...] = (x * attn).astype(o_ref.dtype)       # concat_feature * attention_weights


def temporal_attn(weighted_features, weight, bias, *, tm_target=1024):
    """weighted_features: [..., T]; weight: [H, T]; bias: [H]; requires H == T."""
    orig_shape = weighted_features.shape
    T = orig_shape[-1]
    H = weight.shape[0]
    assert H == T, "TemporalAttn forward requires hidden_size == time_step_size"

    dtype = weighted_features.dtype
    x2d = weighted_features.reshape(-1, T)
    M = x2d.shape[0]

    # ---- lane packing: fold P rows of width T into one 128-lane row -----------
    P = (128 // T) if (T < 128 and 128 % T == 0) else 1
    L = P * T

    M_pad = ((M + P - 1) // P) * P
    if M_pad != M:
        x2d = jnp.pad(x2d, ((0, M_pad - M), (0, 0)))   # zero rows -> zero outputs
    Mp = M_pad // P
    xp = x2d.reshape(Mp, L)

    w_t = weight.T.astype(dtype)                       # (T, H)
    if P > 1:
        wp = jnp.kron(jnp.eye(P, dtype=dtype), w_t)    # (L, L) block-diagonal
        bp = jnp.tile(bias.astype(dtype), P).reshape(1, L)
    else:
        wp = w_t
        bp = bias.astype(dtype).reshape(1, L)

    # ---- 1-D grid over packed rows (multiple-of-8 tiles, whole array if small) -
    if Mp <= tm_target:
        TM = Mp                                        # full-extent block is legal
    else:
        TM = tm_target                                 # multiple of 8
        Mp_new = ((Mp + TM - 1) // TM) * TM
        if Mp_new != Mp:
            xp = jnp.pad(xp, ((0, Mp_new - Mp), (0, 0)))
            Mp = Mp_new
    grid = (Mp // TM,)

    itemsize = jnp.dtype(dtype).itemsize
    flops = 2 * Mp * L * L + 3 * Mp * L
    bytes_accessed = (2 * Mp * L + L * L + L) * itemsize

    out = pl.pallas_call(
        _temporal_attn_kernel,
        out_shape=jax.ShapeDtypeStruct((Mp, L), dtype),
        grid=grid,
        in_specs=[
            pl.BlockSpec((TM, L), lambda i: (i, 0)),   # x tiles stream through VMEM
            pl.BlockSpec((L, L), lambda i: (0, 0)),    # weight resident
            pl.BlockSpec((1, L), lambda i: (0, 0)),    # bias resident
        ],
        out_specs=pl.BlockSpec((TM, L), lambda i: (i, 0)),
        compiler_params=pltpu.CompilerParams(
            dimension_semantics=("parallel",)),
        cost_estimate=pl.CostEstimate(
            flops=flops, transcendentals=0, bytes_accessed=bytes_accessed),
    )(xp, wp, bp)

    return out.reshape(-1, T)[:M].reshape(orig_shape)


def reference(weighted_features, weight, bias):
    y = jnp.einsum("...t,ht->...h", weighted_features, weight) + bias
    attn = jnp.maximum(y, 0.0)
    return weighted_features * attn


if __name__ == "__main__":
    # time_step_size == hidden_size == 32 (required by the elementwise multiply)
    B, S, T = 2, 8, 32
    H = T

    key = jax.random.PRNGKey(0)
    kx, kw, kb, kx2 = jax.random.split(key, 4)

    x = jax.random.normal(kx, (B, S, T), dtype=jnp.float32)
    # Deterministic nn.Linear-style init (uniform in +/- 1/sqrt(T))
    bound = 1.0 / (T ** 0.5)
    weight = jax.random.uniform(kw, (H, T), minval=-bound, maxval=bound, dtype=jnp.float32)
    bias = jax.random.uniform(kb, (H,), minval=-bound, maxval=bound, dtype=jnp.float32)

    # Small test (single grid step, lane-packed).
    out = temporal_attn(x, weight, bias)
    out = jax.block_until_ready(out)
    ref = reference(x, weight, bias)
    assert out.shape == (B, S, T)
    assert jnp.allclose(out, ref, atol=1e-5, rtol=1e-5)

    # Second test exercising row tiling + padding (rows not a multiple of tile).
    x2 = jax.random.normal(kx2, (4, 2600, T), dtype=jnp.float32)
    out2 = jax.block_until_ready(temporal_attn(x2, weight, bias))
    ref2 = reference(x2, weight, bias)
    assert out2.shape == x2.shape
    assert jnp.allclose(out2, ref2, atol=1e-5, rtol=1e-5)

    print("KERNEL_OK")
</pallas_src>

<mosaic_0001>
module attributes {stable_mosaic.version = 11 : i64} {
  func.func @_temporal_attn_kernel(%arg0: i32, %arg1: memref<4x128xf32, #tpu.memory_space<vmem>>, %arg2: memref<128x128xf32, #tpu.memory_space<vmem>>, %arg3: memref<1x128xf32, #tpu.memory_space<vmem>>, %arg4: memref<4x128xf32, #tpu.memory_space<vmem>>) attributes {dimension_semantics = [#tpu.dimension_semantics<parallel>], iteration_bounds = array<i64: 1>, scalar_prefetch = 0 : i64, scratch_operands = 0 : i64, tpu.core_type = #tpu.core_type<tc>, window_params = [{transform_indices = @transform_0, window_bounds = array<i64: 4, 128>}, {pipeline_mode = #tpu.pipeline_mode<synchronous>, transform_indices = @transform_1, window_bounds = array<i64: 128, 128>}, {pipeline_mode = #tpu.pipeline_mode<synchronous>, transform_indices = @transform_2, window_bounds = array<i64: 1, 128>}, {transform_indices = @transform_3, window_bounds = array<i64: 4, 128>}]} {
    %c0 = arith.constant 0 : index
    %c0_0 = arith.constant 0 : index
    %0 = vector.load %arg1[%c0, %c0_0] : memref<4x128xf32, #tpu.memory_space<vmem>>, vector<4x128xf32>
    %c0_1 = arith.constant 0 : index
    %c0_2 = arith.constant 0 : index
    %1 = vector.load %arg2[%c0_1, %c0_2] : memref<128x128xf32, #tpu.memory_space<vmem>>, vector<128x128xf32>
    %cst = arith.constant dense<0.000000e+00> : vector<4x128xf32>
    %2 = tpu.matmul %0, %1, %cst {dimension_numbers = #tpu.dot_dimension_numbers<[1], [0], [0], [1], [0, 0, 1, 1], [], []>} : vector<4x128xf32>, vector<128x128xf32>, vector<4x128xf32> -> vector<4x128xf32>
    %c0_3 = arith.constant 0 : index
    %c0_4 = arith.constant 0 : index
    %3 = vector.load %arg3[%c0_3, %c0_4] : memref<1x128xf32, #tpu.memory_space<vmem>>, vector<1x128xf32>
    %4 = vector.broadcast %3 : vector<1x128xf32> to vector<4x128xf32>
    %5 = arith.addf %2, %4 : vector<4x128xf32>
    %cst_5 = arith.constant 0.000000e+00 : f32
    %6 = vector.broadcast %cst_5 : f32 to vector<4x128xf32>
    %7 = arith.maximumf %5, %6 : vector<4x128xf32>
    %8 = arith.mulf %0, %7 : vector<4x128xf32>
    %c0_6 = arith.constant 0 : index
    %c0_7 = arith.constant 0 : index
    %9 = vector.load %arg4[%c0_6, %c0_7] : memref<4x128xf32, #tpu.memory_space<vmem>>, vector<4x128xf32>
    tpu.vector_store %arg4[%c0_6, %c0_7], %8 {strides = array<i32>} : memref<4x128xf32, #tpu.memory_space<vmem>>, vector<4x128xf32>,
    return
  }
  func.func @transform_0(%arg0: i32) -> (i32, i32) {
    %c0_i32 = arith.constant 0 : i32
    %c0_i32_0 = arith.constant 0 : i32
    return %arg0, %c0_i32 : i32, i32
  }
  func.func @transform_1(%arg0: i32) -> (i32, i32) {
    %c0_i32 = arith.constant 0 : i32
    %c0_i32_0 = arith.constant 0 : i32
    %c0_i32_1 = arith.constant 0 : i32
    return %c0_i32, %c0_i32_0 : i32, i32
  }
  func.func @transform_2(%arg0: i32) -> (i32, i32) {
    %c0_i32 = arith.constant 0 : i32
    %c0_i32_0 = arith.constant 0 : i32
    %c0_i32_1 = arith.constant 0 : i32
    return %c0_i32, %c0_i32_0 : i32, i32
  }
  func.func @transform_3(%arg0: i32) -> (i32, i32) {
    %c0_i32 = arith.constant 0 : i32
    %c0_i32_0 = arith.constant 0 : i32
    return %arg0, %c0_i32 : i32, i32
  }
}

</mosaic_0001>

<llo_original>
// kernel: tpu_custom_call.1
$region0: #{tpu_custom_call.1}
  #allocation0 [shape = 'u32[]', space=smem, size = 0x4, offset = 0x4, fixed_abs, tag = 'smem constant byte address 0x4 - core index']
  #allocation1 [shape = 'u32[72,128]{1,0:T(1,128)}', space=vmem, size = 0x9000, scoped, tag = 'internal scratch']
  %s0 = inlined_call_operand.hbm [shape: f32[4,128], index: 0, kind: input, shape index: {}]
  %s1 = inlined_call_operand.hbm [shape: f32[128,128], index: 1, kind: input, shape index: {}]
  %s2 = inlined_call_operand.vmem [shape: f32[1,128], index: 2, kind: input, shape index: {}]
  %s3 = inlined_call_operand.hbm [shape: f32[4,128], index: 3, kind: output, shape index: {}]
  %s4 = sld [smem:[#allocation0]]
  $region30: #{tpu_custom_call.1} parent=0
    _
  %s6 = ssub.s32 1, %s4
  %s7 = scalar_select 0, %s6, %s4
  $region1: #{tpu_custom_call.1} parent=0
    #allocation2 [shape = 'u8[2048]{0}', space=vmem, size = 0x800, scoped, tag = 'input window, operand 0, single buffered']
    #allocation3 [shape = 's32[1]{0}', space=sflag, size = 0x4, scoped, tag = 'scoped memory for tpu_custom_call.1']
    #allocation4 [shape = 's32[1]{0}', space=sflag, size = 0x4, scoped, tag = 'scoped memory for tpu_custom_call.1']
    #allocation5 [shape = 'u8[65536]{0}', space=vmem, size = 0x10000, scoped, tag = 'input window, operand 1, single buffered']
    #allocation6 [shape = 's32[1]{0}', space=sflag, size = 0x4, scoped, tag = 'scoped memory for tpu_custom_call.1']
    #allocation7 [shape = 'u8[2048]{0}', space=vmem, size = 0x800, scoped, tag = 'output window, operand 0, single buffered']
    %8 = vsyncpa [#allocation3], 0
    %9 = vsyncpa [#allocation6], 0
    %10 = vsyncpa [#allocation4], 0
    // Predicated region
    $region2: #{tpu_custom_call.1} parent=1 // pred_check
      _
    $region3: #{tpu_custom_call.1} parent=1 // pred_check_branch
      %12 = sbr.rel (0) target = $region5
    $region4: #{tpu_custom_call.1} parent=1 // pred_region
      %14 = vsyncadd [#allocation3], 0
      %s16 = sshll.u32 %s0, 4
      %s17 = int_to_ptr.hbm [resolvable:$true] %s16
      %s18 = sshll.u32 [#allocation2], 4
      %s19 = int_to_ptr.vmem [resolvable:$true] %s18
      %21 = dma.hbm_to_vmem [thread:$0]  %s17, 64, %s19, [#allocation3]
    $region5: #{tpu_custom_call.1} parent=1 // pred_fallthru
      _
    // Predicated region
    $region6: #{tpu_custom_call.1} parent=1 // pred_check
      _
    $region7: #{tpu_custom_call.1} parent=1 // pred_check_branch
      %23 = sbr.rel (0) target = $region9
    $region8: #{tpu_custom_call.1} parent=1 // pred_region
      %25 = vsyncadd [#allocation6], 0
      %s26 = sshll.u32 %s1, 4
      %s27 = int_to_ptr.hbm [resolvable:$true] %s26
      %s28 = sshll.u32 [#allocation5], 4
      %s29 = int_to_ptr.vmem [resolvable:$true] %s28
      %34 = dma.hbm_to_vmem [thread:$0]  %s27, 2048, %s29, [#allocation6], 128, 128, 8
    $region9: #{tpu_custom_call.1} parent=1 // pred_fallthru
      _
    // Predicated region
    $region10: #{tpu_custom_call.1} parent=1 // pred_check
      _
    $region11: #{tpu_custom_call.1} parent=1 // pred_check_branch
      %36 = sbr.rel (0) target = $region13
    $region12: #{tpu_custom_call.1} parent=1 // pred_region
      _
    $region13: #{tpu_custom_call.1} parent=1 // pred_fallthru
      _
    // Predicated region
    $region14: #{tpu_custom_call.1} parent=1 // pred_check
      _
    $region15: #{tpu_custom_call.1} parent=1 // pred_check_branch
      %38 = sbr.rel (0) target = $region17
    $region16: #{tpu_custom_call.1} parent=1 // pred_region
      %40 = dma.done [#allocation3], 64
    $region17: #{tpu_custom_call.1} parent=1 // pred_fallthru
      _
    // Predicated region
    $region18: #{tpu_custom_call.1} parent=1 // pred_check
      _
    $region19: #{tpu_custom_call.1} parent=1 // pred_check_branch
      %42 = sbr.rel (0) target = $region21
    $region20: #{tpu_custom_call.1} parent=1 // pred_region
      %44 = dma.done [#allocation6], 2048
    $region21: #{tpu_custom_call.1} parent=1 // pred_fallthru
      _
    %v45 = vld [vmem:[#allocation2] sm:$0xf]
    %v46 = vld [vmem:[#allocation5] sm:$0xff]
    %v47 = vld [vmem:[#allocation5 + $0x8] sm:$0xff]
    %v48 = vld [vmem:[#allocation5 + $0x10] sm:$0xff]
    %v49 = vld [vmem:[#allocation5 + $0x18] sm:$0xff]
    %v50 = vld [vmem:[#allocation5 + $0x20] sm:$0xff]
    %v51 = vld [vmem:[#allocation5 + $0x28] sm:$0xff]
    %v52 = vld [vmem:[#allocation5 + $0x30] sm:$0xff]
    %v53 = vld [vmem:[#allocation5 + $0x38] sm:$0xff]
    %v54 = vld [vmem:[#allocation5 + $0x40] sm:$0xff]
    %v55 = vld [vmem:[#allocation5 + $0x48] sm:$0xff]
    %v56 = vld [vmem:[#allocation5 + $0x50] sm:$0xff]
    %v57 = vld [vmem:[#allocation5 + $0x58] sm:$0xff]
    %v58 = vld [vmem:[#allocation5 + $0x60] sm:$0xff]
    %v59 = vld [vmem:[#allocation5 + $0x68] sm:$0xff]
    %v60 = vld [vmem:[#allocation5 + $0x70] sm:$0xff]
    %v61 = vld [vmem:[#allocation5 + $0x78] sm:$0xff]
    %v62 = vld [vmem:[%s2] sm:$0x1]
    %v64 = vperm.slane %v62, 0
    %66 = vmatpush.msra.mxu0 %v61
    %67 = vmatpush.msra.mxu0 %v60
    %68 = vmatpush.msra.mxu0 %v59
    %69 = vmatpush.msra.mxu0 %v58
    %70 = vmatpush.msra.mxu0 %v57
    %71 = vmatpush.msra.mxu0 %v56
    %72 = vmatpush.msra.mxu0 %v55
    %73 = vmatpush.msra.mxu0 %v54
    %74 = vmatpush.msra.mxu0 %v53
    %75 = vmatpush.msra.mxu0 %v52
    %76 = vmatpush.msra.mxu0 %v51
    %77 = vmatpush.msra.mxu0 %v50
    %78 = vmatpush.msra.mxu0 %v49
    %79 = vmatpush.msra.mxu0 %v48
    %80 = vmatpush.msra.mxu0 %v47
    %81 = vmatpush.msra.mxu0 %v46
    %82 = vmatmul.f32.gmra.mxu0 %v45
    %v83 = vpop.f32.mrf.mxu0
    %v84 = vadd.f32 %v64, %v83
    %85 = vdwg.mxu0
    %v86 = vmax.f32 %v84, 0.0
    %v87 = vmul.f32 %v45, %v86
    %88 = vst [vmem:[#allocation7] sm:$0xf] %v87
    // Predicated region
    $region22: #{tpu_custom_call.1} parent=1 // pred_check
      _
    $region23: #{tpu_custom_call.1} parent=1 // pred_check_branch
      %90 = sbr.rel (0) target = $region25
    $region24: #{tpu_custom_call.1} parent=1 // pred_region
      %92 = vsyncadd [#allocation4], 0
      %s94 = sshll.u32 [#allocation7], 4
      %s95 = int_to_ptr.vmem [resolvable:$true] %s94
      %s96 = sshll.u32 %s3, 4
      %s97 = int_to_ptr.hbm [resolvable:$true] %s96
      %99 = dma.vmem_to_hbm [thread:$0]  %s95, 64, %s97, [#allocation4]
    $region25: #{tpu_custom_call.1} parent=1 // pred_fallthru
      _
    // Predicated region
    $region26: #{tpu_custom_call.1} parent=1 // pred_check
      _
    $region27: #{tpu_custom_call.1} parent=1 // pred_check_branch
      %101 = sbr.rel (0) target = $region29
    $region28: #{tpu_custom_call.1} parent=1 // pred_region
      %103 = dma.done [#allocation4], 64
    $region29: #{tpu_custom_call.1} parent=1 // pred_fallthru
      _
    %104 = vsyncpa [#allocation3], 1
    %105 = vsyncpa [#allocation6], 1
    %106 = vsyncpa [#allocation4], 1

</llo_original>
